<compile_context>
chip_gen: v6e
topology: v6e:2x2x1
jax: 0.10.0
libtpu: 0.0.40
codegen_flags: <defaults>
</compile_context>

<pallas_src>
import functools

import jax
import jax.numpy as jnp
from jax.experimental import pallas as pl
from jax.experimental.pallas import tpu as pltpu

LANES = 128
SUBLANES = 8
MAX_TILE_ROWS = 1024  # (1024,128) f32 = 512 KiB/tile; 2 inputs x 2 bufs = 2 MiB VMEM


def _round_up(x, m):
    return (x + m - 1) // m * m


def _focal_loss_kernel(x_ref, t_ref, out_ref, acc_ref, *,
                       gamma, n_elems, tiles_per_core, tile_rows):
    c = pl.program_id(0)   # core / partition axis ("parallel")
    j = pl.program_id(1)   # sequential tile axis ("arbitrary")
    nj = pl.num_programs(1)

    tile_elems = tile_rows * LANES
    g = c * tiles_per_core + j          # global (unclamped) tile index
    start = g * tile_elems              # flat element index of first element in block

    @pl.when(j == 0)
    def _():
        acc_ref[...] = jnp.zeros_like(acc_ref)

    def compute(masked):
        x = x_ref[...].astype(jnp.float32)
        t = t_ref[...].astype(jnp.float32)
        if masked:
            row = jax.lax.broadcasted_iota(jnp.int32, (tile_rows, LANES), 0)
            lane = jax.lax.broadcasted_iota(jnp.int32, (tile_rows, LANES), 1)
            idx = start + row * LANES + lane
            valid = idx < n_elems
            # Zero invalid elements BEFORE exp/log so padded/duplicated data
            # can never produce NaN/Inf that would poison the sum.
            x = jnp.where(valid, x, 0.0)
            t = jnp.where(valid, t, 0.0)

        # BCE-with-logits, identical to the reference formula
        #   x - x*t + max(-x,0) + log(exp(-max) + exp(-x-max))
        # rewritten with a single shared exp(-|x|):
        e_x = jnp.exp(-jnp.abs(x))
        bce = jnp.maximum(x, 0.0) - x * t + jnp.log(1.0 + e_x)

        # invprobs = logsigmoid(-x*(2t-1)) = min(z,0) - log(1+exp(-|z|)), z = x*(1-2t)
        z = x * (1.0 - 2.0 * t)
        e_z = jnp.exp(-jnp.abs(z))
        invprobs = jnp.minimum(z, 0.0) - jnp.log(1.0 + e_z)

        loss = jnp.exp(invprobs * gamma) * bce
        if masked:
            loss = jnp.where(valid, loss, 0.0)

        # Sublane-group partial accumulate: pure VPU adds into an (8,128) slab.
        acc_ref[...] += jnp.sum(
            loss.reshape(tile_rows // SUBLANES, SUBLANES, LANES), axis=0)

    needs_mask = (start + tile_elems) > n_elems

    @pl.when(needs_mask)
    def _():
        compute(masked=True)

    @pl.when(jnp.logical_not(needs_mask))
    def _():
        compute(masked=False)

    @pl.when(j == nj - 1)
    def _():
        # Single sublane reduce per core: (8,128) -> lane-dense (1,128) partials.
        out_ref[...] = jnp.sum(acc_ref[...], axis=0, keepdims=True)


def focal_loss(input_arr, target_arr, gamma):
    if input_arr.shape != target_arr.shape:
        raise ValueError(
            "Target size ({}) must be the same as input size ({})".format(
                target_arr.shape, input_arr.shape))

    n_elems = int(input_arr.size)
    if n_elems == 0:
        return jnp.array(jnp.nan, dtype=jnp.float32)

    def _prep(a):
        if not jnp.issubdtype(a.dtype, jnp.floating):
            a = a.astype(jnp.float32)
        return a.reshape(-1)

    x = _prep(input_arr)
    t = _prep(target_arr)

    # Choose the tile and pad (only if needed) so the grid divides evenly.
    rows0 = pl.cdiv(n_elems, LANES)
    tile_rows = min(MAX_TILE_ROWS, _round_up(rows0, SUBLANES))
    tile_elems = tile_rows * LANES
    n_pad = (-n_elems) % tile_elems
    if n_pad:
        x = jnp.pad(x, (0, n_pad))
        t = jnp.pad(t, (0, n_pad))
    total = n_elems + n_pad
    rows = total // LANES
    n_tiles = rows // tile_rows

    # Shard row-tiles across the (up to) 2 TensorCores on v7x; harmless on 1-TC chips.
    num_cores = 2 if n_tiles >= 2 else 1
    tiles_per_core = pl.cdiv(n_tiles, num_cores)

    x2 = x.reshape(rows, LANES)
    t2 = t.reshape(rows, LANES)

    def in_map(c, j):
        g = c * tiles_per_core + j
        # Clamp over-shoot steps (odd n_tiles); their contribution is masked in-kernel.
        return (jnp.minimum(g, n_tiles - 1), 0)

    tile_spec = pl.BlockSpec((tile_rows, LANES), in_map)

    kernel = functools.partial(
        _focal_loss_kernel,
        gamma=float(gamma),
        n_elems=n_elems,
        tiles_per_core=int(tiles_per_core),
        tile_rows=int(tile_rows),
    )

    partials = pl.pallas_call(
        kernel,
        out_shape=jax.ShapeDtypeStruct((num_cores, LANES), jnp.float32),
        grid_spec=pltpu.PrefetchScalarGridSpec(
            num_scalar_prefetch=0,
            grid=(num_cores, tiles_per_core),
            in_specs=[tile_spec, tile_spec],
            out_specs=pl.BlockSpec((1, LANES), lambda c, j: (c, 0)),
            scratch_shapes=[pltpu.VMEM((SUBLANES, LANES), jnp.float32)],
        ),
        compiler_params=pltpu.CompilerParams(
            dimension_semantics=("parallel", "arbitrary")),
    )(x2, t2)

    return jnp.sum(partials) / jnp.float32(n_elems)


def focal_loss_ref(input_arr, target_arr, gamma):
    x = input_arr.astype(jnp.float32)
    t = target_arr.astype(jnp.float32)
    max_val = jnp.maximum(-x, 0.0)
    loss = x - x * t + max_val + jnp.log(jnp.exp(-max_val) + jnp.exp(-x - max_val))
    invprobs = jax.nn.log_sigmoid(-x * (t * 2.0 - 1.0))
    loss = jnp.exp(invprobs * gamma) * loss
    return jnp.mean(loss)


if __name__ == "__main__":
    gamma = 2.0  # deterministic module "parameter"

    key = jax.random.PRNGKey(0)
    k1, k2, k3, k4 = jax.random.split(key, 4)

    # Primary case: NCHW logits and binary targets, same shape as the module spec.
    x = jax.random.normal(k1, (2, 4, 16, 16), dtype=jnp.float32)
    tgt = (jax.random.uniform(k2, (2, 4, 16, 16)) > 0.5).astype(jnp.float32)

    out = focal_loss(x, tgt, gamma)
    out = jax.block_until_ready(out)
    ref = focal_loss_ref(x, tgt, gamma)
    assert jnp.allclose(out, ref, rtol=1e-5, atol=1e-5), (out, ref)

    # Ragged (non-128-multiple) shape exercises the padded-tail mask path.
    xr = jax.random.normal(k3, (3, 5, 7, 11), dtype=jnp.float32)
    tr = (jax.random.uniform(k4, (3, 5, 7, 11)) > 0.5).astype(jnp.float32)
    out_r = jax.block_until_ready(focal_loss(xr, tr, gamma))
    ref_r = focal_loss_ref(xr, tr, gamma)
    assert jnp.allclose(out_r, ref_r, rtol=1e-5, atol=1e-5), (out_r, ref_r)

    print("KERNEL_OK")
</pallas_src>

<mosaic_0001>
module attributes {stable_mosaic.version = 11 : i64} {
  func.func @_focal_loss_kernel(%arg0: i32, %arg1: i32, %arg2: memref<16x128xf32, #tpu.memory_space<vmem>>, %arg3: memref<16x128xf32, #tpu.memory_space<vmem>>, %arg4: memref<1x128xf32, #tpu.memory_space<vmem>>, %arg5: memref<8x128xf32, #tpu.memory_space<vmem>>) attributes {dimension_semantics = [#tpu.dimension_semantics<parallel>, #tpu.dimension_semantics<arbitrary>], iteration_bounds = array<i64: 1, 1>, scalar_prefetch = 0 : i64, scratch_operands = 1 : i64, tpu.core_type = #tpu.core_type<tc>, window_params = [{transform_indices = @transform_0, window_bounds = array<i64: 16, 128>}, {transform_indices = @transform_1, window_bounds = array<i64: 16, 128>}, {transform_indices = @transform_2, window_bounds = array<i64: 1, 128>}]} {
    %c1_i32 = arith.constant 1 : i32
    %0 = arith.muli %arg0, %c1_i32 : i32
    %1 = arith.addi %0, %arg1 : i32
    %c2048_i32 = arith.constant 2048 : i32
    %2 = arith.muli %1, %c2048_i32 : i32
    %c0_i32 = arith.constant 0 : i32
    %3 = arith.cmpi eq, %arg1, %c0_i32 : i32
    %4 = arith.extui %3 : i1 to i32
    %c0_i32_0 = arith.constant 0 : i32
    %5 = arith.cmpi ne, %4, %c0_i32_0 : i32
    scf.if %5 {
      %cst = arith.constant 0.000000e+00 : f32
      %16 = vector.broadcast %cst : f32 to vector<8x128xf32>
      %c0 = arith.constant 0 : index
      %c0_7 = arith.constant 0 : index
      %17 = vector.load %arg5[%c0, %c0_7] : memref<8x128xf32, #tpu.memory_space<vmem>>, vector<8x128xf32>
      tpu.vector_store %arg5[%c0, %c0_7], %16 {strides = array<i32>} : memref<8x128xf32, #tpu.memory_space<vmem>>, vector<8x128xf32>,
    } else {
    }
    %c2048_i32_1 = arith.constant 2048 : i32
    %6 = arith.addi %2, %c2048_i32_1 : i32
    %c2048_i32_2 = arith.constant 2048 : i32
    %7 = arith.cmpi sgt, %6, %c2048_i32_2 : i32
    %8 = arith.extui %7 : i1 to i32
    %c0_i32_3 = arith.constant 0 : i32
    %9 = arith.cmpi ne, %8, %c0_i32_3 : i32
    scf.if %9 {
      %c0 = arith.constant 0 : index
      %c0_7 = arith.constant 0 : index
      %16 = vector.load %arg2[%c0, %c0_7] : memref<16x128xf32, #tpu.memory_space<vmem>>, vector<16x128xf32>
      %c0_8 = arith.constant 0 : index
      %c0_9 = arith.constant 0 : index
      %17 = vector.load %arg3[%c0_8, %c0_9] : memref<16x128xf32, #tpu.memory_space<vmem>>, vector<16x128xf32>
      %18 = tpu.iota {dimensions = array<i32: 0>} : vector<16x128xi32>
      %19 = tpu.iota {dimensions = array<i32: 1>} : vector<16x128xi32>
      %c128_i32 = arith.constant 128 : i32
      %20 = vector.broadcast %c128_i32 : i32 to vector<16x128xi32>
      %21 = arith.muli %18, %20 : vector<16x128xi32>
      %22 = vector.broadcast %2 : i32 to vector<16x128xi32>
      %23 = arith.addi %22, %21 : vector<16x128xi32>
      %24 = arith.addi %23, %19 : vector<16x128xi32>
      %c2048_i32_10 = arith.constant 2048 : i32
      %25 = vector.broadcast %c2048_i32_10 : i32 to vector<16x128xi32>
      %26 = arith.cmpi slt, %24, %25 : vector<16x128xi32>
      %cst = arith.constant 0.000000e+00 : f32
      %27 = vector.broadcast %cst : f32 to vector<16x128xf32>
      %28 = arith.select %26, %16, %27 : vector<16x128xi1>, vector<16x128xf32>
      %cst_11 = arith.constant 0.000000e+00 : f32
      %29 = vector.broadcast %cst_11 : f32 to vector<16x128xf32>
      %30 = arith.select %26, %17, %29 : vector<16x128xi1>, vector<16x128xf32>
      %31 = math.absf %28 : vector<16x128xf32>
      %cst_12 = arith.constant 0.000000e+00 : f32
      %32 = vector.broadcast %cst_12 : f32 to vector<16x128xf32>
      %33 = arith.subf %32, %31 : vector<16x128xf32>
      %34 = math.exp %33 : vector<16x128xf32>
      %cst_13 = arith.constant 0.000000e+00 : f32
      %35 = vector.broadcast %cst_13 : f32 to vector<16x128xf32>
      %36 = arith.maximumf %28, %35 : vector<16x128xf32>
      %37 = arith.mulf %28, %30 : vector<16x128xf32>
      %38 = arith.subf %36, %37 : vector<16x128xf32>
      %cst_14 = arith.constant 1.000000e+00 : f32
      %39 = vector.broadcast %cst_14 : f32 to vector<16x128xf32>
      %40 = arith.addf %39, %34 : vector<16x128xf32>
      %41 = math.log %40 : vector<16x128xf32>
      %42 = arith.addf %38, %41 : vector<16x128xf32>
      %cst_15 = arith.constant 2.000000e+00 : f32
      %43 = vector.broadcast %cst_15 : f32 to vector<16x128xf32>
      %44 = arith.mulf %43, %30 : vector<16x128xf32>
      %cst_16 = arith.constant 1.000000e+00 : f32
      %45 = vector.broadcast %cst_16 : f32 to vector<16x128xf32>
      %46 = arith.subf %45, %44 : vector<16x128xf32>
      %47 = arith.mulf %28, %46 : vector<16x128xf32>
      %48 = math.absf %47 : vector<16x128xf32>
      %cst_17 = arith.constant 0.000000e+00 : f32
      %49 = vector.broadcast %cst_17 : f32 to vector<16x128xf32>
      %50 = arith.subf %49, %48 : vector<16x128xf32>
      %51 = math.exp %50 : vector<16x128xf32>
      %cst_18 = arith.constant 0.000000e+00 : f32
      %52 = vector.broadcast %cst_18 : f32 to vector<16x128xf32>
      %53 = arith.minimumf %47, %52 : vector<16x128xf32>
      %cst_19 = arith.constant 1.000000e+00 : f32
      %54 = vector.broadcast %cst_19 : f32 to vector<16x128xf32>
      %55 = arith.addf %54, %51 : vector<16x128xf32>
      %56 = math.log %55 : vector<16x128xf32>
      %57 = arith.subf %53, %56 : vector<16x128xf32>
      %cst_20 = arith.constant 2.000000e+00 : f32
      %58 = vector.broadcast %cst_20 : f32 to vector<16x128xf32>
      %59 = arith.mulf %57, %58 : vector<16x128xf32>
      %60 = math.exp %59 : vector<16x128xf32>
      %61 = arith.mulf %60, %42 : vector<16x128xf32>
      %cst_21 = arith.constant 0.000000e+00 : f32
      %62 = vector.broadcast %cst_21 : f32 to vector<16x128xf32>
      %63 = arith.select %26, %61, %62 : vector<16x128xi1>, vector<16x128xf32>
      %c0_22 = arith.constant 0 : index
      %c0_23 = arith.constant 0 : index
      %64 = vector.load %arg5[%c0_22, %c0_23] : memref<8x128xf32, #tpu.memory_space<vmem>>, vector<8x128xf32>
      %65 = vector.shape_cast %63 : vector<16x128xf32> to vector<2x8x128xf32>
      %cst_24 = arith.constant dense<0.000000e+00> : vector<8x128xf32>
      %66 = vector.multi_reduction <add>, %65, %cst_24 [0] : vector<2x8x128xf32> to vector<8x128xf32>
      %67 = arith.addf %64, %66 : vector<8x128xf32>
      %c0_25 = arith.constant 0 : index
      %c0_26 = arith.constant 0 : index
      %68 = vector.load %arg5[%c0_25, %c0_26] : memref<8x128xf32, #tpu.memory_space<vmem>>, vector<8x128xf32>
      tpu.vector_store %arg5[%c0_25, %c0_26], %67 {strides = array<i32>} : memref<8x128xf32, #tpu.memory_space<vmem>>, vector<8x128xf32>,
    } else {
    }
    %true = arith.constant true
    %10 = arith.xori %7, %true : i1
    %11 = arith.extui %10 : i1 to i32
    %c0_i32_4 = arith.constant 0 : i32
    %12 = arith.cmpi ne, %11, %c0_i32_4 : i32
    scf.if %12 {
      %c0 = arith.constant 0 : index
      %c0_7 = arith.constant 0 : index
      %16 = vector.load %arg2[%c0, %c0_7] : memref<16x128xf32, #tpu.memory_space<vmem>>, vector<16x128xf32>
      %c0_8 = arith.constant 0 : index
      %c0_9 = arith.constant 0 : index
      %17 = vector.load %arg3[%c0_8, %c0_9] : memref<16x128xf32, #tpu.memory_space<vmem>>, vector<16x128xf32>
      %18 = math.absf %16 : vector<16x128xf32>
      %cst = arith.constant 0.000000e+00 : f32
      %19 = vector.broadcast %cst : f32 to vector<16x128xf32>
      %20 = arith.subf %19, %18 : vector<16x128xf32>
      %21 = math.exp %20 : vector<16x128xf32>
      %cst_10 = arith.constant 0.000000e+00 : f32
      %22 = vector.broadcast %cst_10 : f32 to vector<16x128xf32>
      %23 = arith.maximumf %16, %22 : vector<16x128xf32>
      %24 = arith.mulf %16, %17 : vector<16x128xf32>
      %25 = arith.subf %23, %24 : vector<16x128xf32>
      %cst_11 = arith.constant 1.000000e+00 : f32
      %26 = vector.broadcast %cst_11 : f32 to vector<16x128xf32>
      %27 = arith.addf %26, %21 : vector<16x128xf32>
      %28 = math.log %27 : vector<16x128xf32>
      %29 = arith.addf %25, %28 : vector<16x128xf32>
      %cst_12 = arith.constant 2.000000e+00 : f32
      %30 = vector.broadcast %cst_12 : f32 to vector<16x128xf32>
      %31 = arith.mulf %30, %17 : vector<16x128xf32>
      %cst_13 = arith.constant 1.000000e+00 : f32
      %32 = vector.broadcast %cst_13 : f32 to vector<16x128xf32>
      %33 = arith.subf %32, %31 : vector<16x128xf32>
      %34 = arith.mulf %16, %33 : vector<16x128xf32>
      %35 = math.absf %34 : vector<16x128xf32>
      %cst_14 = arith.constant 0.000000e+00 : f32
      %36 = vector.broadcast %cst_14 : f32 to vector<16x128xf32>
      %37 = arith.subf %36, %35 : vector<16x128xf32>
      %38 = math.exp %37 : vector<16x128xf32>
      %cst_15 = arith.constant 0.000000e+00 : f32
      %39 = vector.broadcast %cst_15 : f32 to vector<16x128xf32>
      %40 = arith.minimumf %34, %39 : vector<16x128xf32>
      %cst_16 = arith.constant 1.000000e+00 : f32
      %41 = vector.broadcast %cst_16 : f32 to vector<16x128xf32>
      %42 = arith.addf %41, %38 : vector<16x128xf32>
      %43 = math.log %42 : vector<16x128xf32>
      %44 = arith.subf %40, %43 : vector<16x128xf32>
      %cst_17 = arith.constant 2.000000e+00 : f32
      %45 = vector.broadcast %cst_17 : f32 to vector<16x128xf32>
      %46 = arith.mulf %44, %45 : vector<16x128xf32>
      %47 = math.exp %46 : vector<16x128xf32>
      %48 = arith.mulf %47, %29 : vector<16x128xf32>
      %c0_18 = arith.constant 0 : index
      %c0_19 = arith.constant 0 : index
      %49 = vector.load %arg5[%c0_18, %c0_19] : memref<8x128xf32, #tpu.memory_space<vmem>>, vector<8x128xf32>
      %50 = vector.shape_cast %48 : vector<16x128xf32> to vector<2x8x128xf32>
      %cst_20 = arith.constant dense<0.000000e+00> : vector<8x128xf32>
      %51 = vector.multi_reduction <add>, %50, %cst_20 [0] : vector<2x8x128xf32> to vector<8x128xf32>
      %52 = arith.addf %49, %51 : vector<8x128xf32>
      %c0_21 = arith.constant 0 : index
      %c0_22 = arith.constant 0 : index
      %53 = vector.load %arg5[%c0_21, %c0_22] : memref<8x128xf32, #tpu.memory_space<vmem>>, vector<8x128xf32>
      tpu.vector_store %arg5[%c0_21, %c0_22], %52 {strides = array<i32>} : memref<8x128xf32, #tpu.memory_space<vmem>>, vector<8x128xf32>,
    } else {
    }
    %c0_i32_5 = arith.constant 0 : i32
    %13 = arith.cmpi eq, %arg1, %c0_i32_5 : i32
    %14 = arith.extui %13 : i1 to i32
    %c0_i32_6 = arith.constant 0 : i32
    %15 = arith.cmpi ne, %14, %c0_i32_6 : i32
    scf.if %15 {
      %c0 = arith.constant 0 : index
      %c0_7 = arith.constant 0 : index
      %16 = vector.load %arg5[%c0, %c0_7] : memref<8x128xf32, #tpu.memory_space<vmem>>, vector<8x128xf32>
      %cst = arith.constant dense<0.000000e+00> : vector<128xf32>
      %17 = vector.multi_reduction <add>, %16, %cst [0] : vector<8x128xf32> to vector<128xf32>
      %18 = vector.shape_cast %17 : vector<128xf32> to vector<1x128xf32>
      %c0_8 = arith.constant 0 : index
      %c0_9 = arith.constant 0 : index
      %19 = vector.load %arg4[%c0_8, %c0_9] : memref<1x128xf32, #tpu.memory_space<vmem>>, vector<1x128xf32>
      tpu.vector_store %arg4[%c0_8, %c0_9], %18 {strides = array<i32>} : memref<1x128xf32, #tpu.memory_space<vmem>>, vector<1x128xf32>,
    } else {
    }
    return
  }
  func.func @transform_0(%arg0: i32, %arg1: i32) -> (i32, i32) {
    %c1_i32 = arith.constant 1 : i32
    %0 = arith.muli %arg0, %c1_i32 : i32
    %1 = arith.addi %0, %arg1 : i32
    %c0_i32 = arith.constant 0 : i32
    %2 = arith.minsi %1, %c0_i32 : i32
    %c0_i32_0 = arith.constant 0 : i32
    %c0_i32_1 = arith.constant 0 : i32
    return %2, %c0_i32_0 : i32, i32
  }
  func.func @transform_1(%arg0: i32, %arg1: i32) -> (i32, i32) {
    %c1_i32 = arith.constant 1 : i32
    %0 = arith.muli %arg0, %c1_i32 : i32
    %1 = arith.addi %0, %arg1 : i32
    %c0_i32 = arith.constant 0 : i32
    %2 = arith.minsi %1, %c0_i32 : i32
    %c0_i32_0 = arith.constant 0 : i32
    %c0_i32_1 = arith.constant 0 : i32
    return %2, %c0_i32_0 : i32, i32
  }
  func.func @transform_2(%arg0: i32, %arg1: i32) -> (i32, i32) {
    %c0_i32 = arith.constant 0 : i32
    %c0_i32_0 = arith.constant 0 : i32
    return %arg0, %c0_i32 : i32, i32
  }
}

</mosaic_0001>

<llo_original>
// kernel: tpu_custom_call.1
$region0: #{tpu_custom_call.1}
  #allocation0 [shape = 'u32[]', space=smem, size = 0x4, offset = 0x4, fixed_abs, tag = 'smem constant byte address 0x4 - core index']
  #allocation1 [shape = 'u32[144,128]{1,0:T(1,128)}', space=vmem, size = 0x12000, scoped, tag = 'internal scratch']
  #allocation2 [shape = 'f32[8,128]{1,0:T(8,128)}', space=vmem, size = 0x1000, scoped, tag = 'scratch operand']
  %s0 = inlined_call_operand.hbm [shape: f32[16,128], index: 0, kind: input, shape index: {}]
  %s1 = inlined_call_operand.hbm [shape: f32[16,128], index: 1, kind: input, shape index: {}]
  %s2 = inlined_call_operand.hbm [shape: f32[1,128], index: 2, kind: output, shape index: {}]
  %s3 = sld [smem:[#allocation0]]
  $region42: #{tpu_custom_call.1} parent=0
    _
  %s5 = ssub.s32 1, %s3
  %s6 = scalar_select 0, %s5, %s3
  $region1: #{tpu_custom_call.1} parent=0
    #allocation3 [shape = 'u8[8192]{0}', space=vmem, size = 0x2000, scoped, tag = 'input window, operand 0, single buffered']
    #allocation4 [shape = 's32[1]{0}', space=sflag, size = 0x4, scoped, tag = 'scoped memory for tpu_custom_call.1']
    #allocation5 [shape = 's32[1]{0}', space=sflag, size = 0x4, scoped, tag = 'scoped memory for tpu_custom_call.1']
    #allocation6 [shape = 'u8[8192]{0}', space=vmem, size = 0x2000, scoped, tag = 'input window, operand 1, single buffered']
    #allocation7 [shape = 's32[1]{0}', space=sflag, size = 0x4, scoped, tag = 'scoped memory for tpu_custom_call.1']
    #allocation8 [shape = 'u8[512]{0}', space=vmem, size = 0x400, scoped, tag = 'output window, operand 0, single buffered']
    %7 = vsyncpa [#allocation4], 0
    %8 = vsyncpa [#allocation7], 0
    %9 = vsyncpa [#allocation5], 0
    // Predicated region
    $region2: #{tpu_custom_call.1} parent=1 // pred_check
      _
    $region3: #{tpu_custom_call.1} parent=1 // pred_check_branch
      %11 = sbr.rel (0) target = $region5
    $region4: #{tpu_custom_call.1} parent=1 // pred_region
      %s12 = sadd.s32 0, 0
      %p13 = scmp.lt.s32.totalorder %s12, 0
      %s14 = scalar_select %p13, %s12, 0
      %s15 = smul.u32 2, %s14
      %s17 = ssub.s32 256, 256
      %18 = vsyncadd [#allocation4], %s17
      %s19 = smul.addr %s15, 128
      %s20 = scalar_lea.hbm %s0, %s19
      %s21 = sshll.u32 [#allocation3], 4
      %s22 = int_to_ptr.vmem [resolvable:$true] %s21
      %27 = dma.hbm_to_vmem [thread:$0]  %s20, 256, %s22, [#allocation4], 128, 128, 8
    $region5: #{tpu_custom_call.1} parent=1 // pred_fallthru
      _
    // Predicated region
    $region6: #{tpu_custom_call.1} parent=1 // pred_check
      _
    $region7: #{tpu_custom_call.1} parent=1 // pred_check_branch
      %29 = sbr.rel (0) target = $region9
    $region8: #{tpu_custom_call.1} parent=1 // pred_region
      %s30 = sadd.s32 0, 0
      %p31 = scmp.lt.s32.totalorder %s30, 0
      %s32 = scalar_select %p31, %s30, 0
      %s33 = smul.u32 2, %s32
      %s35 = ssub.s32 256, 256
      %36 = vsyncadd [#allocation7], %s35
      %s37 = smul.addr %s33, 128
      %s38 = scalar_lea.hbm %s1, %s37
      %s39 = sshll.u32 [#allocation6], 4
      %s40 = int_to_ptr.vmem [resolvable:$true] %s39
      %45 = dma.hbm_to_vmem [thread:$0]  %s38, 256, %s40, [#allocation7], 128, 128, 8
    $region9: #{tpu_custom_call.1} parent=1 // pred_fallthru
      _
    // Predicated region
    $region10: #{tpu_custom_call.1} parent=1 // pred_check
      _
    $region11: #{tpu_custom_call.1} parent=1 // pred_check_branch
      %47 = sbr.rel (0) target = $region13
    $region12: #{tpu_custom_call.1} parent=1 // pred_region
      %48 = dma.done [#allocation4], 256
    $region13: #{tpu_custom_call.1} parent=1 // pred_fallthru
      _
    // Predicated region
    $region14: #{tpu_custom_call.1} parent=1 // pred_check
      _
    $region15: #{tpu_custom_call.1} parent=1 // pred_check_branch
      %50 = sbr.rel (0) target = $region17
    $region16: #{tpu_custom_call.1} parent=1 // pred_region
      %51 = dma.done [#allocation7], 256
    $region17: #{tpu_custom_call.1} parent=1 // pred_fallthru
      _
    %s52 = sadd.s32 0, 0
    %p53 = scmp.lt.s32.totalorder %s52, 0
    %s54 = scalar_select %p53, %s52, 0
    %s55 = smul.u32 2, %s54
    %s56 = sadd.s32 0, 0
    %p57 = scmp.lt.s32.totalorder %s56, 0
    %s58 = scalar_select %p57, %s56, 0
    %s59 = smul.u32 2, %s58
    %s60 = sadd.s32 0, 0
    %s61 = smul.u32 %s60, 2048
    %p62 = scmp.eq.s32.totalorder 0, 0
    // Predicated region
    $region18: #{tpu_custom_call.1} parent=1 // pred_check
      %p63 = pneg %p62
    $region19: #{tpu_custom_call.1} parent=1 // pred_check_branch
      %65 = sbr.rel (%p63) target = $region21
    $region20: #{tpu_custom_call.1} parent=1 // pred_region
      %66 = vst [vmem:[#allocation2] sm:$0xff] 0.0
    $region21: #{tpu_custom_call.1} parent=1 // pred_fallthru
      _
    %s67 = sadd.s32 %s61, 2048
    %p68 = scmp.gt.s32.totalorder %s67, 2048
    // Predicated region
    $region22: #{tpu_custom_call.1} parent=1 // pred_check
      %p69 = pneg %p68
    $region23: #{tpu_custom_call.1} parent=1 // pred_check_branch
      %71 = sbr.rel (%p69) target = $region25
    $region24: #{tpu_custom_call.1} parent=1 // pred_region
      %v72 = vld [vmem:[#allocation3] sm:$0xff]
      %v73 = vld [vmem:[#allocation3 + $0x8] sm:$0xff]
      %v74 = vld [vmem:[#allocation6] sm:$0xff]
      %v75 = vld [vmem:[#allocation6 + $0x8] sm:$0xff]
      %v76 = vlaneseq
      %v77 = vshrl.u32 %v76, 7
      %v78 = vadd.s32 %v77, 8
      %v79 = vlaneseq
      %v80 = vand.u32 %v79, 127
      %v81 = vmul.u32 %v77, 128
      %v82 = vmul.u32 %v78, 128
      %v83 = vstv %s61
      %v84 = vadd.s32 %v83, %v81
      %v85 = vadd.s32 %v83, %v82
      %v86 = vadd.s32 %v84, %v80
      %v87 = vadd.s32 %v85, %v80
      %vm88 = vcmp.lt.s32.totalorder %v86, 2048
      %vm89 = vcmp.lt.s32.totalorder %v87, 2048
      %v90 = vsel %vm88, %v72, 0.0
      %v91 = vsel %vm89, %v73, 0.0
      %v92 = vsel %vm88, %v74, 0.0
      %v93 = vsel %vm89, %v75, 0.0
      %v94 = vand.u32 2147483647, %v90
      %v95 = vand.u32 2147483647, %v91
      %v96 = vsub.f32 0.0, %v94
      %v97 = vsub.f32 0.0, %v95
      %v98 = vmul.f32 %v96, 1.442695
      %v99 = vpow.pop %v98
      %v100 = vmul.f32 %v97, 1.442695
      %v101 = vpow.pop %v100
      %v102 = vmax.f32 %v90, 0.0
      %v103 = vmax.f32 %v91, 0.0
      %v104 = vmul.f32 %v90, %v92
      %v105 = vmul.f32 %v91, %v93
      %v106 = vsub.f32 %v102, %v104
      %v107 = vsub.f32 %v103, %v105
      %v108 = vadd.f32 %v99, 1.0
      %v109 = vadd.f32 %v101, 1.0
      %v110 = vlog2.pop %v108
      %v111 = vmul.f32 %v110, 0.6931472
      %v112 = vlog2.pop %v109
      %v113 = vmul.f32 %v112, 0.6931472
      %v114 = vadd.f32 %v106, %v111
      %v115 = vadd.f32 %v107, %v113
      %v116 = vmul.f32 %v92, 2.0
      %v117 = vmul.f32 %v93, 2.0
      %v118 = vsub.f32 1.0, %v116
      %v119 = vsub.f32 1.0, %v117
      %v120 = vmul.f32 %v90, %v118
      %v121 = vmul.f32 %v91, %v119
      %v122 = vand.u32 2147483647, %v120
      %v123 = vand.u32 2147483647, %v121
      %v124 = vsub.f32 0.0, %v122
      %v125 = vsub.f32 0.0, %v123
      %v126 = vmul.f32 %v124, 1.442695
      %v127 = vpow.pop %v126
      %v128 = vmul.f32 %v125, 1.442695
      %v129 = vpow.pop %v128
      %v130 = vmin.f32 %v120, 0.0
      %v131 = vmin.f32 %v121, 0.0
      %v132 = vadd.f32 %v127, 1.0
      %v133 = vadd.f32 %v129, 1.0
      %v134 = vlog2.pop %v132
      %v135 = vmul.f32 %v134, 0.6931472
      %v136 = vlog2.pop %v133
      %v137 = vmul.f32 %v136, 0.6931472
      %v138 = vsub.f32 %v130, %v135
      %v139 = vsub.f32 %v131, %v137
      %v140 = vmul.f32 %v138, 2.0
      %v141 = vmul.f32 %v139, 2.0
      %v142 = vmul.f32 %v140, 1.442695
      %v143 = vpow.pop %v142
      %v144 = vmul.f32 %v141, 1.442695
      %v145 = vpow.pop %v144
      %v146 = vmul.f32 %v143, %v114
      %v147 = vmul.f32 %v145, %v115
      %v148 = vsel %vm88, %v146, 0.0
      %v149 = vsel %vm89, %v147, 0.0
      %v150 = vld [vmem:[#allocation2] sm:$0xff]
      %v151 = vadd.f32 %v148, %v149
      %v152 = vadd.f32 %v150, %v151
      %153 = vst [vmem:[#allocation2] sm:$0xff] %v152
    $region25: #{tpu_custom_call.1} parent=1 // pred_fallthru
      _
    %p154 = scmp.le.s32.totalorder %s67, 2048
    // Predicated region
    $region26: #{tpu_custom_call.1} parent=1 // pred_check
      %p155 = pneg %p154
    $region27: #{tpu_custom_call.1} parent=1 // pred_check_branch
      %157 = sbr.rel (%p155) target = $region29
    $region28: #{tpu_custom_call.1} parent=1 // pred_region
      %v158 = vld [vmem:[#allocation3] sm:$0xff]
      %v159 = vld [vmem:[#allocation3 + $0x8] sm:$0xff]
      %v160 = vld [vmem:[#allocation6] sm:$0xff]
      %v161 = vld [vmem:[#allocation6 + $0x8] sm:$0xff]
      %v162 = vand.u32 2147483647, %v158
      %v163 = vand.u32 2147483647, %v159
      %v164 = vsub.f32 0.0, %v162
      %v165 = vsub.f32 0.0, %v163
      %v166 = vmul.f32 %v164, 1.442695
      %v167 = vpow.pop %v166
      %v168 = vmul.f32 %v165, 1.442695
      %v169 = vpow.pop %v168
      %v170 = vmax.f32 %v158, 0.0
      %v171 = vmax.f32 %v159, 0.0
      %v172 = vmul.f32 %v158, %v160
      %v173 = vmul.f32 %v159, %v161
      %v174 = vsub.f32 %v170, %v172
      %v175 = vsub.f32 %v171, %v173
      %v176 = vadd.f32 %v167, 1.0
      %v177 = vadd.f32 %v169, 1.0
      %v178 = vlog2.pop %v176
      %v179 = vmul.f32 %v178, 0.6931472
      %v180 = vlog2.pop %v177
      %v181 = vmul.f32 %v180, 0.6931472
      %v182 = vadd.f32 %v174, %v179
      %v183 = vadd.f32 %v175, %v181
      %v184 = vmul.f32 %v160, 2.0
      %v185 = vmul.f32 %v161, 2.0
      %v186 = vsub.f32 1.0, %v184
      %v187 = vsub.f32 1.0, %v185
      %v188 = vmul.f32 %v158, %v186
      %v189 = vmul.f32 %v159, %v187
      %v190 = vand.u32 2147483647, %v188
      %v191 = vand.u32 2147483647, %v189
      %v192 = vsub.f32 0.0, %v190
      %v193 = vsub.f32 0.0, %v191
      %v194 = vmul.f32 %v192, 1.442695
      %v195 = vpow.pop %v194
      %v196 = vmul.f32 %v193, 1.442695
      %v197 = vpow.pop %v196
      %v198 = vmin.f32 %v188, 0.0
      %v199 = vmin.f32 %v189, 0.0
      %v200 = vadd.f32 %v195, 1.0
      %v201 = vadd.f32 %v197, 1.0
      %v202 = vlog2.pop %v200
      %v203 = vmul.f32 %v202, 0.6931472
      %v204 = vlog2.pop %v201
      %v205 = vmul.f32 %v204, 0.6931472
      %v206 = vsub.f32 %v198, %v203
      %v207 = vsub.f32 %v199, %v205
      %v208 = vmul.f32 %v206, 2.0
      %v209 = vmul.f32 %v207, 2.0
      %v210 = vmul.f32 %v208, 1.442695
      %v211 = vpow.pop %v210
      %v212 = vmul.f32 %v209, 1.442695
      %v213 = vpow.pop %v212
      %v214 = vmul.f32 %v211, %v182
      %v215 = vmul.f32 %v213, %v183
      %v216 = vld [vmem:[#allocation2] sm:$0xff]
      %v217 = vadd.f32 %v214, %v215
      %v218 = vadd.f32 %v216, %v217
      %219 = vst [vmem:[#allocation2] sm:$0xff] %v218
    $region29: #{tpu_custom_call.1} parent=1 // pred_fallthru
      _
    // Predicated region
    $region30: #{tpu_custom_call.1} parent=1 // pred_check
      %p220 = pneg %p62
    $region31: #{tpu_custom_call.1} parent=1 // pred_check_branch
      %222 = sbr.rel (%p220) target = $region33
    $region32: #{tpu_custom_call.1} parent=1 // pred_region
      %v223 = vld [vmem:[#allocation2] sm:$0xff]
      %v224 = vrot.slane %v223, 4
      %v225 = vadd.f32 %v223, %v224
      %v226 = vrot.slane %v225, 2
      %v227 = vadd.f32 %v225, %v226
      %v228 = vrot.slane %v227, 1
      %v229 = vadd.f32 %v227, %v228
      %230 = vst [vmem:[#allocation8] sm:$0x1] %v229
    $region33: #{tpu_custom_call.1} parent=1 // pred_fallthru
      _
    // Predicated region
    $region34: #{tpu_custom_call.1} parent=1 // pred_check
      _
    $region35: #{tpu_custom_call.1} parent=1 // pred_check_branch
      %232 = sbr.rel (0) target = $region37
    $region36: #{tpu_custom_call.1} parent=1 // pred_region
      %s234 = ssub.s32 16, 16
      %235 = vsyncadd [#allocation5], %s234
      %s237 = sshll.u32 [#allocation8], 4
      %s238 = int_to_ptr.vmem [resolvable:$true] %s237
      %240 = dma.vmem_to_hbm [thread:$0]  %s238, 16, %s2, [#allocation5]
    $region37: #{tpu_custom_call.1} parent=1 // pred_fallthru
      _
    // Predicated region
    $region38: #{tpu_custom_call.1} parent=1 // pred_check
      _
    $region39: #{tpu_custom_call.1} parent=1 // pred_check_branch
      %242 = sbr.rel (0) target = $region41
    $region40: #{tpu_custom_call.1} parent=1 // pred_region
      %243 = dma.done [#allocation5], 16
    $region41: #{tpu_custom_call.1} parent=1 // pred_fallthru
      _
    %244 = vsyncpa [#allocation4], 1
    %245 = vsyncpa [#allocation7], 1
    %246 = vsyncpa [#allocation5], 1

</llo_original>
